<compile_context>
chip_gen: v6e
topology: v6e:2x2x1
jax: 0.10.0
libtpu: 0.0.40
codegen_flags: <defaults>
</compile_context>

<pallas_src>
import jax
import jax.numpy as jnp
from jax.experimental import pallas as pl
from jax.experimental.pallas import tpu as pltpu

N_HEAD_PAD = 128   # lane-tile-aligned width of the fused (action|value) head matrix in VMEM
N_OUT_PAD = 8      # real HBM output width (action 4 + value 1, padded to 8 lanes)


def _round_up(x, m):
    return ((x + m - 1) // m) * m


# ----------------------------- Pallas kernel ------------------------------- #
def baseline_kernel(x_ref, w1x_ref, w2h_ref, bias_ref, out_ref):
    """Fused BaselineModel forward for one batch row-tile.

    x slab lanes:   [0:obs_dim] = obs, [obs_dim] = reward (ScalarInput folded in).
    bias slab rows: 0 = fused layer-1 bias, 1 = b2, 2 = fused head bias.
    w2h slab lanes: [0:H] = W2, [128:128+N_HEAD_PAD] = fused head matrix.
    """
    f32 = jnp.float32
    H = w1x_ref.shape[1]                       # hidden width (32)

    b1f   = bias_ref[0:1, 0:H]                 # [1, H]
    b2    = bias_ref[1:2, 0:H]                 # [1, H]
    bhead = bias_ref[2:3, :]                   # [1, 128]

    w2    = w2h_ref[:, 0:H]                    # [H, H]
    whead = w2h_ref[:, 128:]                   # [H, N_HEAD_PAD]

    # layer 1: LinearInput('obs') + ScalarInput('reward') + concat + first Linear + ReLU,
    # all algebraically fused into one matmul (reward is the last input column).
    h = jnp.maximum(
        jnp.dot(x_ref[...], w1x_ref[...], preferred_element_type=f32) + b1f, 0.0)

    # layer 2: second Linear + ReLU
    h = jnp.maximum(jnp.dot(h, w2, preferred_element_type=f32) + b2, 0.0)

    # both LinearOutput heads (attention weight == 1) as one matmul; compute the full
    # 128 lanes in VMEM, store only the real lanes to HBM (writeback is the bottleneck).
    out = jnp.dot(h, whead, preferred_element_type=f32) + bhead
    out_ref[...] = out[:, :out_ref.shape[1]]


# ------------------------ host-side algebraic fusion ------------------------ #
def prepare_params(params, out_order=('action', 'value')):
    """Collapse the purely-linear chains offline and pack operands into slabs."""
    V = params['w_obs'].shape[1]                 # value_size
    H1 = params['w1'].shape[1]
    H2 = params['w2'].shape[1]
    assert H1 == H2, "slab packing assumes architecture[-2] == architecture[-1]"
    H = H1
    assert H <= 128

    w1_top = params['w1'][:V, :]                 # obs-value rows of first Linear
    w1_bot = params['w1'][V:, :]                 # reward-value rows

    # obs path is linear up to the first ReLU; the ScalarInput broadcast + concat
    # reduce to reward * colsum(W1[V:]), folded in as one extra weight row.
    w1x = jnp.concatenate(
        [params['w_obs'] @ w1_top, jnp.sum(w1_bot, axis=0, keepdims=True)], axis=0)
    b1f = params['b_obs'] @ w1_top + params['b1']                    # [1, H]

    # Each LinearOutput: zero key + single kv position + num_heads=1 => softmax
    # weight == 1, so the head collapses to out_proj(v_proj(x)) @ ff == wv@wo@wf.
    # NOTE: this fusion is invalid if >1 kv position or nonzero keys are ever used.
    heads_w, heads_b, sizes = [], [], []
    for name in out_order:
        p = params[name]
        assert p['wv'].shape == (H, H) and p['wo'].shape == (H, H)
        w = p['wv'] @ p['wo'] @ p['wf']                              # [H, out]
        b = p['bv'] @ p['wo'] @ p['wf'] + p['bo'] @ p['wf'] + p['bf']
        heads_w.append(w); heads_b.append(b); sizes.append(p['wf'].shape[1])
    w_head = jnp.concatenate(heads_w, axis=1)
    b_head = jnp.concatenate(heads_b, axis=1)
    n_out = w_head.shape[1]
    assert n_out <= N_OUT_PAD <= N_HEAD_PAD
    w_head = jnp.pad(w_head, ((0, 0), (0, N_HEAD_PAD - n_out)))
    b_head = jnp.pad(b_head, ((0, 0), (0, N_HEAD_PAD - n_out)))

    # Pack W2 and the fused head matrix into one [H, 128 + N_HEAD_PAD] slab;
    # lane offsets 0 and 128 keep both slices vreg-tile aligned.
    w2h = jnp.zeros((H, 128 + N_HEAD_PAD), jnp.float32)
    w2h = w2h.at[:, :H].set(params['w2'])
    w2h = w2h.at[:, 128:].set(w_head)

    # Pack every bias-like row into one [3, 128] slab (single small DMA).
    bias = jnp.zeros((3, 128), jnp.float32)
    bias = bias.at[0, :H].set(b1f[0])
    bias = bias.at[1, :H].set(params['b2'][0])
    bias = bias.at[2, :].set(b_head[0, :128])

    return {'w1x': w1x, 'w2h': w2h, 'bias': bias,
            'out_order': tuple(out_order),
            'out_sizes': dict(zip(out_order, sizes))}


# ------------------------------- wrapper ------------------------------------ #
def baseline_forward(prepared, inputs, *, row_tile=2048):
    obs = inputs['obs'].astype(jnp.float32)        # [B, obs_dim]
    reward = inputs['reward'].astype(jnp.float32)  # [B, 1]
    B, obs_dim = obs.shape
    D = obs_dim + 1

    # Fold reward into one dense [B, obs_dim+1] activation stream (one DMA per tile).
    x = jnp.concatenate([obs, reward], axis=1)
    B_pad = _round_up(B, 8)                        # sublane multiple only, not TB multiple
    if B_pad != B:
        x = jnp.pad(x, ((0, B_pad - B), (0, 0)))

    H = prepared['w1x'].shape[1]

    # Row tile: big enough to amortize the ~0.35us/step overhead, capped at 2048 so the
    # double-buffered footprint (~TB * 3.5 KiB) fits v5e's 16 MiB scoped-VMEM default
    # and v7x's 32 MiB without extra flags.
    TB = min(_round_up(row_tile, 8), B_pad, 2048)
    # v7x has 2 TensorCores sharing the "parallel" axis: prefer >= 2 grid steps.
    if B_pad > 8 and pl.cdiv(B_pad, TB) < 2:
        TB = max(8, _round_up(pl.cdiv(B_pad, 2), 8))
    grid = (pl.cdiv(B_pad, TB),)                   # partial last tile handled by Pallas

    cost = pl.CostEstimate(
        flops=2 * B_pad * (D * H + H * H + H * N_HEAD_PAD),
        transcendentals=0,
        bytes_accessed=4 * (B_pad * (D + N_OUT_PAD)
                            + D * H + H * (128 + N_HEAD_PAD) + 3 * 128),
    )

    out = pl.pallas_call(
        baseline_kernel,
        out_shape=jax.ShapeDtypeStruct((B_pad, N_OUT_PAD), jnp.float32),
        grid_spec=pltpu.PrefetchScalarGridSpec(
            num_scalar_prefetch=0,
            grid=grid,
            in_specs=[
                pl.BlockSpec((TB, D), lambda i: (i, 0)),                # [obs|reward] tile
                pl.BlockSpec((D, H), lambda i: (0, 0)),                 # fused layer-1 W
                pl.BlockSpec((H, 128 + N_HEAD_PAD), lambda i: (0, 0)),  # W2 | W_head slab
                pl.BlockSpec((3, 128), lambda i: (0, 0)),               # bias slab
            ],
            out_specs=pl.BlockSpec((TB, N_OUT_PAD), lambda i: (i, 0)),
        ),
        compiler_params=pltpu.CompilerParams(
            dimension_semantics=("parallel",)),    # batch tiles shard across TCs on v7x
        cost_estimate=cost,
    )(x, prepared['w1x'], prepared['w2h'], prepared['bias'])

    result = {}
    off = 0
    for name in prepared['out_order']:
        n = prepared['out_sizes'][name]
        result[name] = out[:B, off:off + n]
        off += n
    result['misc'] = {}
    return result


# ------------------------- deterministic parameters ------------------------- #
def init_params(key, obs_dim, value_size, architecture, out_sizes):
    def linear(k, fan_in, fan_out):
        k1, k2 = jax.random.split(k)
        bound = 1.0 / float(fan_in) ** 0.5
        w = jax.random.uniform(k1, (fan_in, fan_out), jnp.float32, -bound, bound)
        b = jax.random.uniform(k2, (1, fan_out), jnp.float32, -bound, bound)
        return w, b

    input_size = 2 * value_size               # 'obs' + 'reward' value concatenation
    arch = [input_size, *architecture]
    key_size = arch[-1]

    keys = iter(jax.random.split(key, 32))
    params = {}
    params['w_obs'], params['b_obs'] = linear(next(keys), obs_dim, value_size)
    params['w1'], params['b1'] = linear(next(keys), arch[0], arch[1])
    params['w2'], params['b2'] = linear(next(keys), arch[1], arch[2])
    for head, out_size in out_sizes.items():
        wv, bv = linear(next(keys), key_size, key_size)   # attention in_proj (V)
        wo, bo = linear(next(keys), key_size, key_size)   # attention out_proj
        wf, bf = linear(next(keys), key_size, out_size)   # LinearOutput.ff
        params[head] = {'wv': wv, 'bv': bv, 'wo': wo, 'bo': bo, 'wf': wf, 'bf': bf}
    return params


# ---------------------------- pure-JAX reference ----------------------------- #
def baseline_reference(params, inputs):
    """Unfused reference following the PyTorch module's forward literally."""
    obs, reward = inputs['obs'], inputs['reward']
    B = obs.shape[0]
    value_size = params['w_obs'].shape[1]
    obs_val = obs @ params['w_obs'] + params['b_obs']
    reward_val = jnp.broadcast_to(reward, (B, value_size))
    values = jnp.concatenate([obs_val, reward_val], axis=1)
    h = jnp.maximum(values @ params['w1'] + params['b1'], 0.0)
    h = jnp.maximum(h @ params['w2'] + params['b2'], 0.0)
    out = {}
    for head in ('action', 'value'):
        p = params[head]
        v = h @ p['wv'] + p['bv']        # attention value proj (softmax weight == 1)
        a = v @ p['wo'] + p['bo']        # attention out proj
        out[head] = a @ p['wf'] + p['bf']
    out['misc'] = {}
    return out


if __name__ == "__main__":
    B, OBS_DIM, VALUE_SIZE = 2, 16, 32
    ARCHITECTURE = [32, 32]
    OUT_SIZES = {'action': 4, 'value': 1}

    root = jax.random.PRNGKey(0)
    k_params, k_obs, k_rew = jax.random.split(root, 3)
    params = init_params(k_params, OBS_DIM, VALUE_SIZE, ARCHITECTURE, OUT_SIZES)
    prepared = prepare_params(params)

    inputs = {
        'obs': jax.random.normal(k_obs, (B, OBS_DIM), jnp.float32),
        'reward': jax.random.normal(k_rew, (B, 1), jnp.float32),
    }

    out = jax.block_until_ready(baseline_forward(prepared, inputs))
    ref = baseline_reference(params, inputs)

    assert out['action'].shape == (B, 4) and out['value'].shape == (B, 1)
    # fused (pre-collapsed) math reorders fp32 sums vs the reference -> ~1e-6 diffs
    assert jnp.allclose(out['action'], ref['action'], atol=1e-4, rtol=1e-4)
    assert jnp.allclose(out['value'], ref['value'], atol=1e-4, rtol=1e-4)
    print("KERNEL_OK")
</pallas_src>

<mosaic_0001>
module attributes {stable_mosaic.version = 11 : i64} {
  func.func @baseline_kernel(%arg0: i32, %arg1: memref<8x17xf32, #tpu.memory_space<vmem>>, %arg2: memref<17x32xf32, #tpu.memory_space<vmem>>, %arg3: memref<32x256xf32, #tpu.memory_space<vmem>>, %arg4: memref<3x128xf32, #tpu.memory_space<vmem>>, %arg5: memref<8x8xf32, #tpu.memory_space<vmem>>) attributes {dimension_semantics = [#tpu.dimension_semantics<parallel>], iteration_bounds = array<i64: 1>, scalar_prefetch = 0 : i64, scratch_operands = 0 : i64, tpu.core_type = #tpu.core_type<tc>, window_params = [{transform_indices = @transform_0, window_bounds = array<i64: 8, 17>}, {pipeline_mode = #tpu.pipeline_mode<synchronous>, transform_indices = @transform_1, window_bounds = array<i64: 17, 32>}, {pipeline_mode = #tpu.pipeline_mode<synchronous>, transform_indices = @transform_2, window_bounds = array<i64: 32, 256>}, {pipeline_mode = #tpu.pipeline_mode<synchronous>, transform_indices = @transform_3, window_bounds = array<i64: 3, 128>}, {transform_indices = @transform_4, window_bounds = array<i64: 8, 8>}]} {
    %c0 = arith.constant 0 : index
    %c0_0 = arith.constant 0 : index
    %0 = vector.load %arg4[%c0, %c0_0] : memref<3x128xf32, #tpu.memory_space<vmem>>, vector<1x32xf32>
    %c1 = arith.constant 1 : index
    %c0_1 = arith.constant 0 : index
    %1 = vector.load %arg4[%c1, %c0_1] : memref<3x128xf32, #tpu.memory_space<vmem>>, vector<1x32xf32>
    %c2 = arith.constant 2 : index
    %c0_2 = arith.constant 0 : index
    %2 = vector.load %arg4[%c2, %c0_2] : memref<3x128xf32, #tpu.memory_space<vmem>>, vector<1x128xf32>
    %c0_3 = arith.constant 0 : index
    %c0_4 = arith.constant 0 : index
    %3 = vector.load %arg3[%c0_3, %c0_4] : memref<32x256xf32, #tpu.memory_space<vmem>>, vector<32x32xf32>
    %c0_5 = arith.constant 0 : index
    %c128 = arith.constant 128 : index
    %4 = vector.load %arg3[%c0_5, %c128] : memref<32x256xf32, #tpu.memory_space<vmem>>, vector<32x128xf32>
    %c0_6 = arith.constant 0 : index
    %c0_7 = arith.constant 0 : index
    %5 = vector.load %arg1[%c0_6, %c0_7] : memref<8x17xf32, #tpu.memory_space<vmem>>, vector<8x17xf32>
    %c0_8 = arith.constant 0 : index
    %c0_9 = arith.constant 0 : index
    %6 = vector.load %arg2[%c0_8, %c0_9] : memref<17x32xf32, #tpu.memory_space<vmem>>, vector<17x32xf32>
    %cst = arith.constant dense<0.000000e+00> : vector<8x32xf32>
    %7 = tpu.matmul %5, %6, %cst {dimension_numbers = #tpu.dot_dimension_numbers<[1], [0], [0], [1], [0, 0, 1, 1], [], []>} : vector<8x17xf32>, vector<17x32xf32>, vector<8x32xf32> -> vector<8x32xf32>
    %8 = vector.broadcast %0 : vector<1x32xf32> to vector<8x32xf32>
    %9 = arith.addf %7, %8 : vector<8x32xf32>
    %cst_10 = arith.constant 0.000000e+00 : f32
    %10 = vector.broadcast %cst_10 : f32 to vector<8x32xf32>
    %11 = arith.maximumf %9, %10 : vector<8x32xf32>
    %cst_11 = arith.constant dense<0.000000e+00> : vector<8x32xf32>
    %12 = tpu.matmul %11, %3, %cst_11 {dimension_numbers = #tpu.dot_dimension_numbers<[1], [0], [0], [1], [0, 0, 1, 1], [], []>} : vector<8x32xf32>, vector<32x32xf32>, vector<8x32xf32> -> vector<8x32xf32>
    %13 = vector.broadcast %1 : vector<1x32xf32> to vector<8x32xf32>
    %14 = arith.addf %12, %13 : vector<8x32xf32>
    %cst_12 = arith.constant 0.000000e+00 : f32
    %15 = vector.broadcast %cst_12 : f32 to vector<8x32xf32>
    %16 = arith.maximumf %14, %15 : vector<8x32xf32>
    %cst_13 = arith.constant dense<0.000000e+00> : vector<8x128xf32>
    %17 = tpu.matmul %16, %4, %cst_13 {dimension_numbers = #tpu.dot_dimension_numbers<[1], [0], [0], [1], [0, 0, 1, 1], [], []>} : vector<8x32xf32>, vector<32x128xf32>, vector<8x128xf32> -> vector<8x128xf32>
    %18 = vector.broadcast %2 : vector<1x128xf32> to vector<8x128xf32>
    %19 = arith.addf %17, %18 : vector<8x128xf32>
    %20 = vector.extract_strided_slice %19 {offsets = [0, 0], sizes = [8, 8], strides = [1, 1]} : vector<8x128xf32> to vector<8x8xf32>
    %c0_14 = arith.constant 0 : index
    %c0_15 = arith.constant 0 : index
    %21 = vector.load %arg5[%c0_14, %c0_15] : memref<8x8xf32, #tpu.memory_space<vmem>>, vector<8x8xf32>
    tpu.vector_store %arg5[%c0_14, %c0_15], %20 {strides = array<i32>} : memref<8x8xf32, #tpu.memory_space<vmem>>, vector<8x8xf32>,
    return
  }
  func.func @transform_0(%arg0: i32) -> (i32, i32) {
    %c0_i32 = arith.constant 0 : i32
    %c0_i32_0 = arith.constant 0 : i32
    return %arg0, %c0_i32 : i32, i32
  }
  func.func @transform_1(%arg0: i32) -> (i32, i32) {
    %c0_i32 = arith.constant 0 : i32
    %c0_i32_0 = arith.constant 0 : i32
    %c0_i32_1 = arith.constant 0 : i32
    return %c0_i32, %c0_i32_0 : i32, i32
  }
  func.func @transform_2(%arg0: i32) -> (i32, i32) {
    %c0_i32 = arith.constant 0 : i32
    %c0_i32_0 = arith.constant 0 : i32
    %c0_i32_1 = arith.constant 0 : i32
    return %c0_i32, %c0_i32_0 : i32, i32
  }
  func.func @transform_3(%arg0: i32) -> (i32, i32) {
    %c0_i32 = arith.constant 0 : i32
    %c0_i32_0 = arith.constant 0 : i32
    %c0_i32_1 = arith.constant 0 : i32
    return %c0_i32, %c0_i32_0 : i32, i32
  }
  func.func @transform_4(%arg0: i32) -> (i32, i32) {
    %c0_i32 = arith.constant 0 : i32
    %c0_i32_0 = arith.constant 0 : i32
    return %arg0, %c0_i32 : i32, i32
  }
}

</mosaic_0001>

<llo_original>
// kernel: tpu_custom_call.1
$region0: #{tpu_custom_call.1}
  #allocation0 [shape = 'u32[]', space=smem, size = 0x4, offset = 0x4, fixed_abs, tag = 'smem constant byte address 0x4 - core index']
  #allocation1 [shape = 'u32[144,128]{1,0:T(1,128)}', space=vmem, size = 0x12000, scoped, tag = 'internal scratch']
  %s0 = inlined_call_operand.hbm [shape: f32[8,17], index: 0, kind: input, shape index: {}]
  %s1 = inlined_call_operand.hbm [shape: f32[17,32], index: 1, kind: input, shape index: {}]
  %s2 = inlined_call_operand.hbm [shape: f32[32,256], index: 2, kind: input, shape index: {}]
  %s3 = inlined_call_operand.vmem [shape: f32[3,128], index: 3, kind: input, shape index: {}]
  %s4 = inlined_call_operand.hbm [shape: f32[8,8], index: 4, kind: output, shape index: {}]
  %s5 = sld [smem:[#allocation0]]
  $region38: #{tpu_custom_call.1} parent=0
    _
  %s7 = ssub.s32 1, %s5
  %s8 = scalar_select 0, %s7, %s5
  $region1: #{tpu_custom_call.1} parent=0
    #allocation2 [shape = 'u8[4096]{0}', space=vmem, size = 0x1000, scoped, tag = 'input window, operand 0, single buffered']
    #allocation3 [shape = 's32[1]{0}', space=sflag, size = 0x4, scoped, tag = 'scoped memory for tpu_custom_call.1']
    #allocation4 [shape = 's32[1]{0}', space=sflag, size = 0x4, scoped, tag = 'scoped memory for tpu_custom_call.1']
    #allocation5 [shape = 'u8[12288]{0}', space=vmem, size = 0x3000, scoped, tag = 'input window, operand 1, single buffered']
    #allocation6 [shape = 's32[1]{0}', space=sflag, size = 0x4, scoped, tag = 'scoped memory for tpu_custom_call.1']
    #allocation7 [shape = 'u8[32768]{0}', space=vmem, size = 0x8000, scoped, tag = 'input window, operand 2, single buffered']
    #allocation8 [shape = 'u8[4096]{0}', space=vmem, size = 0x1000, scoped, tag = 'output window, operand 0, single buffered']
    %9 = vsyncpa [#allocation3], 0
    %10 = vsyncpa [#allocation6], 0
    %11 = vsyncpa [#allocation4], 0
    // Predicated region
    $region2: #{tpu_custom_call.1} parent=1 // pred_check
      _
    $region3: #{tpu_custom_call.1} parent=1 // pred_check_branch
      %13 = sbr.rel (0) target = $region5
    $region4: #{tpu_custom_call.1} parent=1 // pred_region
      %s15 = ssub.s32 128, 128
      %16 = vsyncadd [#allocation3], %s15
      %s18 = sshll.u32 [#allocation2], 4
      %s19 = int_to_ptr.vmem [resolvable:$true] %s18
      %21 = dma.hbm_to_vmem [thread:$0]  %s0, 128, %s19, [#allocation3]
    $region5: #{tpu_custom_call.1} parent=1 // pred_fallthru
      _
    // Predicated region
    $region6: #{tpu_custom_call.1} parent=1 // pred_check
      _
    $region7: #{tpu_custom_call.1} parent=1 // pred_check_branch
      %23 = sbr.rel (0) target = $region9
    $region8: #{tpu_custom_call.1} parent=1 // pred_region
      %s25 = ssub.s32 384, 384
      %26 = vsyncadd [#allocation6], %s25
      %s27 = sshll.u32 [#allocation5], 4
      %s28 = int_to_ptr.vmem [resolvable:$true] %s27
      %33 = dma.hbm_to_vmem [thread:$0]  %s1, 384, %s28, [#allocation6], 128, 128, 8
    $region9: #{tpu_custom_call.1} parent=1 // pred_fallthru
      _
    // Predicated region
    $region10: #{tpu_custom_call.1} parent=1 // pred_check
      _
    $region11: #{tpu_custom_call.1} parent=1 // pred_check_branch
      %35 = sbr.rel (0) target = $region13
    $region12: #{tpu_custom_call.1} parent=1 // pred_region
      %s37 = ssub.s32 1024, 1024
      %38 = vsyncadd [#allocation6], %s37
      %s39 = sshll.u32 [#allocation7], 4
      %s40 = int_to_ptr.vmem [resolvable:$true] %s39
      %45 = dma.hbm_to_vmem [thread:$0]  %s2, 1024, %s40, [#allocation6], 256, 256, 16
    $region13: #{tpu_custom_call.1} parent=1 // pred_fallthru
      _
    // Predicated region
    $region14: #{tpu_custom_call.1} parent=1 // pred_check
      _
    $region15: #{tpu_custom_call.1} parent=1 // pred_check_branch
      %47 = sbr.rel (0) target = $region17
    $region16: #{tpu_custom_call.1} parent=1 // pred_region
      _
    $region17: #{tpu_custom_call.1} parent=1 // pred_fallthru
      _
    // Predicated region
    $region18: #{tpu_custom_call.1} parent=1 // pred_check
      _
    $region19: #{tpu_custom_call.1} parent=1 // pred_check_branch
      %49 = sbr.rel (0) target = $region21
    $region20: #{tpu_custom_call.1} parent=1 // pred_region
      %50 = dma.done [#allocation3], 128
    $region21: #{tpu_custom_call.1} parent=1 // pred_fallthru
      _
    // Predicated region
    $region22: #{tpu_custom_call.1} parent=1 // pred_check
      _
    $region23: #{tpu_custom_call.1} parent=1 // pred_check_branch
      %52 = sbr.rel (0) target = $region25
    $region24: #{tpu_custom_call.1} parent=1 // pred_region
      %53 = dma.done [#allocation6], 384
    $region25: #{tpu_custom_call.1} parent=1 // pred_fallthru
      _
    // Predicated region
    $region26: #{tpu_custom_call.1} parent=1 // pred_check
      _
    $region27: #{tpu_custom_call.1} parent=1 // pred_check_branch
      %55 = sbr.rel (0) target = $region29
    $region28: #{tpu_custom_call.1} parent=1 // pred_region
      %56 = dma.done [#allocation6], 1024
    $region29: #{tpu_custom_call.1} parent=1 // pred_fallthru
      _
    %v57 = vld [vmem:[%s3] sm:$0x1]
    %v58 = vld [vmem:[%s3 + $0x1] sm:$0x1]
    %v59 = vld [vmem:[%s3 + $0x2] sm:$0x1]
    %v60 = vld [vmem:[#allocation7] sm:$0xff]
    %v61 = vld [vmem:[#allocation7 + $0x10] sm:$0xff]
    %v62 = vld [vmem:[#allocation7 + $0x20] sm:$0xff]
    %v63 = vld [vmem:[#allocation7 + $0x30] sm:$0xff]
    %v64 = vld [vmem:[#allocation7 + $0x8] sm:$0xff]
    %v65 = vld [vmem:[#allocation7 + $0x18] sm:$0xff]
    %v66 = vld [vmem:[#allocation7 + $0x28] sm:$0xff]
    %v67 = vld [vmem:[#allocation7 + $0x38] sm:$0xff]
    %v68 = vld [vmem:[#allocation2] sm:$0xff]
    %v69 = vld [vmem:[#allocation5] sm:$0xff]
    %v70 = vld [vmem:[#allocation5 + $0x8] sm:$0xff]
    %v71 = vld [vmem:[#allocation5 + $0x10] sm:$0x1]
    %v72 = vlaneseq
    %v73 = vshrl.u32 %v72, 7
    %v74 = vsub.s32 0, %v73
    %v75 = vrot.slane %v57, %v74
    %vm76 = vcmask 138240
    %v78 = vsel %vm76, %v68, 0
    %vm80 = vcmask 1040384
    %v82 = vsel %vm80, %v71, 0
    %84 = vmatprep.subr.mxu0 0.0
    %85 = vmatpush1.msra.mxu0 0.0
    %86 = vmatprep.subr.mxu0 0.0
    %87 = vmatpush1.msra.mxu0 0.0
    %88 = vmatprep.subr.mxu0 0.0
    %89 = vmatpush1.msra.mxu0 0.0
    %90 = vmatprep.subr.mxu0 0.0
    %91 = vmatpush1.msra.mxu0 0.0
    %92 = vmatprep.subr.mxu0 0.0
    %93 = vmatpush1.msra.mxu0 0.0
    %94 = vmatprep.subr.mxu0 0.0
    %95 = vmatpush1.msra.mxu0 0.0
    %96 = vmatprep.subr.mxu0 0.0
    %97 = vmatpush1.msra.mxu0 0.0
    %98 = vmatprep.subr.mxu0 0.0
    %99 = vmatpush1.msra.mxu0 0.0
    %100 = vmatprep.subr.mxu0 0.0
    %101 = vmatpush1.msra.mxu0 0.0
    %102 = vmatprep.subr.mxu0 0.0
    %103 = vmatpush1.msra.mxu0 0.0
    %104 = vmatprep.subr.mxu0 0.0
    %105 = vmatpush1.msra.mxu0 0.0
    %106 = vmatprep.subr.mxu0 0.0
    %107 = vmatpush1.msra.mxu0 0.0
    %108 = vmatprep.subr.mxu0 0.0
    %109 = vmatpush1.msra.mxu0 0.0
    %110 = vmatprep.subr.mxu0 0.0
    %111 = vmatpush1.msra.mxu0 %v82
    %112 = vmatprep.subr.mxu0 0.0
    %113 = vmatpush1.msra.mxu0 %v70
    %114 = vmatprep.subr.mxu0 0.0
    %115 = vmatpush1.msra.mxu0 %v69
    %116 = vmatprep.subr.mxu0 0.0
    %117 = vmatpush2.msra.mxu0 0.0
    %118 = vmatprep.subr.mxu0 0.0
    %119 = vmatpush2.msra.mxu0 0.0
    %120 = vmatprep.subr.mxu0 0.0
    %121 = vmatpush2.msra.mxu0 0.0
    %122 = vmatprep.subr.mxu0 0.0
    %123 = vmatpush2.msra.mxu0 0.0
    %124 = vmatprep.subr.mxu0 0.0
    %125 = vmatpush2.msra.mxu0 0.0
    %126 = vmatprep.subr.mxu0 0.0
    %127 = vmatpush2.msra.mxu0 0.0
    %128 = vmatprep.subr.mxu0 0.0
    %129 = vmatpush2.msra.mxu0 0.0
    %130 = vmatprep.subr.mxu0 0.0
    %131 = vmatpush2.msra.mxu0 0.0
    %132 = vmatprep.subr.mxu0 0.0
    %133 = vmatpush2.msra.mxu0 0.0
    %134 = vmatprep.subr.mxu0 0.0
    %135 = vmatpush2.msra.mxu0 0.0
    %136 = vmatprep.subr.mxu0 0.0
    %137 = vmatpush2.msra.mxu0 0.0
    %138 = vmatprep.subr.mxu0 0.0
    %139 = vmatpush2.msra.mxu0 0.0
    %140 = vmatprep.subr.mxu0 0.0
    %141 = vmatpush2.msra.mxu0 0.0
    %142 = vmatprep.subr.mxu0 0.0
    %143 = vmatpush2.msra.mxu0 0.0
    %144 = vmatprep.subr.mxu0 0.0
    %145 = vmatpush2.msra.mxu0 0.0
    %146 = vmatprep.subr.mxu0 0.0
    %147 = vmatpush2.msra.mxu0 0.0
    %148 = vmatprep.mubr.f32.mxu0 0.0
    %149 = vmatmul.mubr.f32.gmra.mxu0 %v78
    %v150 = vpop.f32.mrf.mxu0
    %v151 = vadd.f32 %v75, %v150
    %v152 = vpop.f32.mrf.mxu0
    %153 = vdwg.mxu0
    %v154 = vmax.f32 %v151, 0.0
    %v155 = vlaneseq
    %v156 = vshrl.u32 %v155, 7
    %v157 = vsub.s32 0, %v156
    %v158 = vrot.slane %v58, %v157
    %vm159 = vcmask 261120
    %v161 = vsel %vm159, %v154, 0
    %163 = vmatprep.subr.mxu0 0.0
    %164 = vmatpush1.msra.mxu0 0.0
    %165 = vmatprep.subr.mxu0 0.0
    %166 = vmatpush1.msra.mxu0 0.0
    %167 = vmatprep.subr.mxu0 0.0
    %168 = vmatpush1.msra.mxu0 0.0
    %169 = vmatprep.subr.mxu0 0.0
    %170 = vmatpush1.msra.mxu0 0.0
    %171 = vmatprep.subr.mxu0 0.0
    %172 = vmatpush1.msra.mxu0 0.0
    %173 = vmatprep.subr.mxu0 0.0
    %174 = vmatpush1.msra.mxu0 0.0
    %175 = vmatprep.subr.mxu0 0.0
    %176 = vmatpush1.msra.mxu0 0.0
    %177 = vmatprep.subr.mxu0 0.0
    %178 = vmatpush1.msra.mxu0 0.0
    %179 = vmatprep.subr.mxu0 0.0
    %180 = vmatpush1.msra.mxu0 0.0
    %181 = vmatprep.subr.mxu0 0.0
    %182 = vmatpush1.msra.mxu0 0.0
    %183 = vmatprep.subr.mxu0 0.0
    %184 = vmatpush1.msra.mxu0 0.0
    %185 = vmatprep.subr.mxu0 0.0
    %186 = vmatpush1.msra.mxu0 0.0
    %187 = vmatprep.subr.mxu0 0.0
    %188 = vmatpush1.msra.mxu0 %v63
    %189 = vmatprep.subr.mxu0 0.0
    %190 = vmatpush1.msra.mxu0 %v62
    %191 = vmatprep.subr.mxu0 0.0
    %192 = vmatpush1.msra.mxu0 %v61
    %193 = vmatprep.subr.mxu0 0.0
    %194 = vmatpush1.msra.mxu0 %v60
    %195 = vmatprep.subr.mxu0 0.0
    %196 = vmatpush2.msra.mxu0 0.0
    %197 = vmatprep.subr.mxu0 0.0
    %198 = vmatpush2.msra.mxu0 0.0
    %199 = vmatprep.subr.mxu0 0.0
    %200 = vmatpush2.msra.mxu0 0.0
    %201 = vmatprep.subr.mxu0 0.0
    %202 = vmatpush2.msra.mxu0 0.0
    %203 = vmatprep.subr.mxu0 0.0
    %204 = vmatpush2.msra.mxu0 0.0
    %205 = vmatprep.subr.mxu0 0.0
    %206 = vmatpush2.msra.mxu0 0.0
    %207 = vmatprep.subr.mxu0 0.0
    %208 = vmatpush2.msra.mxu0 0.0
    %209 = vmatprep.subr.mxu0 0.0
    %210 = vmatpush2.msra.mxu0 0.0
    %211 = vmatprep.subr.mxu0 0.0
    %212 = vmatpush2.msra.mxu0 0.0
    %213 = vmatprep.subr.mxu0 0.0
    %214 = vmatpush2.msra.mxu0 0.0
    %215 = vmatprep.subr.mxu0 0.0
    %216 = vmatpush2.msra.mxu0 0.0
    %217 = vmatprep.subr.mxu0 0.0
    %218 = vmatpush2.msra.mxu0 0.0
    %219 = vmatprep.subr.mxu0 0.0
    %220 = vmatpush2.msra.mxu0 0.0
    %221 = vmatprep.subr.mxu0 0.0
    %222 = vmatpush2.msra.mxu0 0.0
    %223 = vmatprep.subr.mxu0 0.0
    %224 = vmatpush2.msra.mxu0 0.0
    %225 = vmatprep.subr.mxu0 0.0
    %226 = vmatpush2.msra.mxu0 0.0
    %227 = vmatprep.mubr.f32.mxu0 0.0
    %228 = vmatmul.mubr.f32.gmra.mxu0 %v161
    %v229 = vpop.f32.mrf.mxu0
    %v230 = vadd.f32 %v158, %v229
    %v231 = vpop.f32.mrf.mxu0
    %232 = vdwg.mxu0
    %v233 = vmax.f32 %v230, 0.0
    %v234 = vlaneseq
    %v235 = vshrl.u32 %v234, 7
    %v236 = vsub.s32 0, %v235
    %v237 = vrot.slane %v59, %v236
    %v239 = vsel %vm159, %v233, 0
    %241 = vmatprep.subr.mxu0 0.0
    %242 = vmatpush1.msra.mxu0 0.0
    %243 = vmatprep.subr.mxu0 0.0
    %244 = vmatpush1.msra.mxu0 0.0
    %245 = vmatprep.subr.mxu0 0.0
    %246 = vmatpush1.msra.mxu0 0.0
    %247 = vmatprep.subr.mxu0 0.0
    %248 = vmatpush1.msra.mxu0 0.0
    %249 = vmatprep.subr.mxu0 0.0
    %250 = vmatpush1.msra.mxu0 0.0
    %251 = vmatprep.subr.mxu0 0.0
    %252 = vmatpush1.msra.mxu0 0.0
    %253 = vmatprep.subr.mxu0 0.0
    %254 = vmatpush1.msra.mxu0 0.0
    %255 = vmatprep.subr.mxu0 0.0
    %256 = vmatpush1.msra.mxu0 0.0
    %257 = vmatprep.subr.mxu0 0.0
    %258 = vmatpush1.msra.mxu0 0.0
    %259 = vmatprep.subr.mxu0 0.0
    %260 = vmatpush1.msra.mxu0 0.0
    %261 = vmatprep.subr.mxu0 0.0
    %262 = vmatpush1.msra.mxu0 0.0
    %263 = vmatprep.subr.mxu0 0.0
    %264 = vmatpush1.msra.mxu0 0.0
    %265 = vmatprep.subr.mxu0 0.0
    %266 = vmatpush1.msra.mxu0 %v67
    %267 = vmatprep.subr.mxu0 0.0
    %268 = vmatpush1.msra.mxu0 %v66
    %269 = vmatprep.subr.mxu0 0.0
    %270 = vmatpush1.msra.mxu0 %v65
    %271 = vmatprep.subr.mxu0 0.0
    %272 = vmatpush1.msra.mxu0 %v64
    %273 = vmatprep.subr.mxu0 0.0
    %274 = vmatpush2.msra.mxu0 0.0
    %275 = vmatprep.subr.mxu0 0.0
    %276 = vmatpush2.msra.mxu0 0.0
    %277 = vmatprep.subr.mxu0 0.0
    %278 = vmatpush2.msra.mxu0 0.0
    %279 = vmatprep.subr.mxu0 0.0
    %280 = vmatpush2.msra.mxu0 0.0
    %281 = vmatprep.subr.mxu0 0.0
    %282 = vmatpush2.msra.mxu0 0.0
    %283 = vmatprep.subr.mxu0 0.0
    %284 = vmatpush2.msra.mxu0 0.0
    %285 = vmatprep.subr.mxu0 0.0
    %286 = vmatpush2.msra.mxu0 0.0
    %287 = vmatprep.subr.mxu0 0.0
    %288 = vmatpush2.msra.mxu0 0.0
    %289 = vmatprep.subr.mxu0 0.0
    %290 = vmatpush2.msra.mxu0 0.0
    %291 = vmatprep.subr.mxu0 0.0
    %292 = vmatpush2.msra.mxu0 0.0
    %293 = vmatprep.subr.mxu0 0.0
    %294 = vmatpush2.msra.mxu0 0.0
    %295 = vmatprep.subr.mxu0 0.0
    %296 = vmatpush2.msra.mxu0 0.0
    %297 = vmatprep.subr.mxu0 0.0
    %298 = vmatpush2.msra.mxu0 0.0
    %299 = vmatprep.subr.mxu0 0.0
    %300 = vmatpush2.msra.mxu0 0.0
    %301 = vmatprep.subr.mxu0 0.0
    %302 = vmatpush2.msra.mxu0 0.0
    %303 = vmatprep.subr.mxu0 0.0
    %304 = vmatpush2.msra.mxu0 0.0
    %305 = vmatprep.mubr.f32.mxu0 0.0
    %306 = vmatmul.mubr.f32.gmra.mxu0 %v239
    %v307 = vpop.f32.mrf.mxu0
    %v308 = vadd.f32 %v237, %v307
    %v309 = vpop.f32.mrf.mxu0
    %310 = vdwg.mxu0
    %vm311 = vcmask 64512
    %312 = vst.msk [vmem:[#allocation8] sm:$0xff] %vm311, %v308
    // Predicated region
    $region30: #{tpu_custom_call.1} parent=1 // pred_check
      _
    $region31: #{tpu_custom_call.1} parent=1 // pred_check_branch
      %314 = sbr.rel (0) target = $region33
    $region32: #{tpu_custom_call.1} parent=1 // pred_region
      %s316 = ssub.s32 128, 128
      %317 = vsyncadd [#allocation4], %s316
      %s319 = sshll.u32 [#allocation8], 4
      %s320 = int_to_ptr.vmem [resolvable:$true] %s319
      %322 = dma.vmem_to_hbm [thread:$0]  %s320, 128, %s4, [#allocation4]
    $region33: #{tpu_custom_call.1} parent=1 // pred_fallthru
      _
    // Predicated region
    $region34: #{tpu_custom_call.1} parent=1 // pred_check
      _
    $region35: #{tpu_custom_call.1} parent=1 // pred_check_branch
      %324 = sbr.rel (0) target = $region37
    $region36: #{tpu_custom_call.1} parent=1 // pred_region
      %325 = dma.done [#allocation4], 128
    $region37: #{tpu_custom_call.1} parent=1 // pred_fallthru
      _
    %326 = vsyncpa [#allocation3], 1
    %327 = vsyncpa [#allocation6], 1
    %328 = vsyncpa [#allocation4], 1

</llo_original>
